<compile_context>
chip_gen: v6e
topology: v6e:2x2x1
jax: 0.10.0
libtpu: 0.0.40
codegen_flags: <defaults>
</compile_context>

<pallas_src>
import jax
import jax.numpy as jnp
from jax import lax
from jax.experimental import pallas as pl
from jax.experimental.pallas import tpu as pltpu

LANES = 128
_CHUNK_ROWS = 256  # rows folded per inner strip (128 KiB f32 temporaries)


def _bce_elementwise(x, t):
    """Numerically stable BCE-with-logits: max(x,0) - x*t + log1p(exp(-|x|))."""
    x = x.astype(jnp.float32)
    t = t.astype(jnp.float32)
    return jnp.maximum(x, 0.0) - x * t + jnp.log1p(jnp.exp(-jnp.abs(x)))


def _sublane_multiple(dtype):
    # Packed-sublane requirement for the second-to-last block dim:
    # 8 for 4-byte, 16 for 2-byte, 32 for 1-byte dtypes.
    itemsize = jnp.dtype(dtype).itemsize
    return max(8, 32 // max(int(itemsize), 1))


def _tensorcores_per_chip():
    """2 on v7x-style chips (2 TC/chip); 1 on v5e/v6e; conservative default 1."""
    try:
        kind = jax.devices()[0].device_kind.lower()
    except Exception:
        return 1
    return 2 if ("v7" in kind or "7x" in kind) else 1


def _make_kernel(*, br, chunk, steps, nblocks, rows_total, gate_validity):
    nchunks = br // chunk
    ragged = (rows_total % br) != 0  # last real row-block is partial

    def kernel(x_ref, t_ref, o_ref):
        i = pl.program_id(1)

        # Zero this slice's resident accumulator at the start of its
        # reduction axis.
        @pl.when(i == 0)
        def _():
            o_ref[...] = jnp.zeros_like(o_ref)

        block_idx = pl.program_id(0) * steps + i  # logical row-block index
        row0 = block_idx * br

        # Strip-wise accumulation: bounds live temporaries to one
        # (chunk, 128) strip regardless of block_rows.
        acc = jnp.zeros((8, LANES), jnp.float32)
        for k in range(nchunks):  # static, fully unrolled (nchunks is small)
            r0 = k * chunk
            xs = x_ref[pl.ds(r0, chunk), :].astype(jnp.float32)
            ts = t_ref[pl.ds(r0, chunk), :].astype(jnp.float32)
            loss = (jnp.maximum(xs, 0.0) - xs * ts
                    + jnp.log1p(jnp.exp(-jnp.abs(xs))))
            if ragged:
                # Zero contributions from rows past the end of the data.
                # Only the very last block is actually partial; elsewhere the
                # select is a no-op and cheap VPU work on this mem-bound op.
                gr = (row0 + r0
                      + lax.broadcasted_iota(jnp.int32, (chunk, LANES), 0))
                loss = jnp.where(gr < rows_total, loss, 0.0)
            # Fold (chunk, 128) -> (8, 128) with vreg-wise VPU adds; the
            # single cross-lane XLU reduce happens once in the wrapper.
            acc = acc + jnp.sum(loss.reshape(-1, 8, LANES), axis=0)

        if gate_validity:
            # Dummy grid points (padding of the core-parallel split) re-read a
            # clamped block; skip their contribution.
            @pl.when(block_idx < nblocks)
            def _():
                o_ref[...] += acc
        else:
            o_ref[...] += acc

    return kernel


def bce_with_logits_loss(logits, target, size_average=True,
                         block_rows=2048, num_slices=None):
    """Pallas TPU implementation of F.binary_cross_entropy_with_logits
    (weight=None).  size_average=True -> mean over all elements, else sum.
    """
    # TODO(synk): the module's optional per-batch `weight` buffer (None by
    # default) is not implemented; a weighted variant would multiply the loss
    # tile by a broadcast per-batch weight row inside the kernel.
    assert logits.shape == target.shape
    n = int(logits.size)
    if n == 0:
        # Matches PyTorch: mean over an empty tensor is NaN, sum is 0.
        return jnp.float32(jnp.nan) if size_average else jnp.float32(0.0)

    x = jnp.ravel(logits)
    t = jnp.ravel(target)

    rows_total = n // LANES          # full 128-lane rows
    aligned = rows_total * LANES     # elements covered by the kernel
    req = max(_sublane_multiple(x.dtype), _sublane_multiple(t.dtype))

    total = jnp.zeros((), jnp.float32)
    kernel_elems = 0

    if rows_total >= req:
        cores = _tensorcores_per_chip()
        want_slices = cores if num_slices is None else max(1, int(num_slices))

        eff_rows = int(block_rows)
        if num_slices is None and cores > 1 and block_rows == 2048:
            # v7x: ~2.3x faster HBM shrinks each step's wall time, so amortize
            # the fixed per-step overhead with bigger tiles.
            eff_rows = 4096

        # Tile height: as large as the data allows, rounded to the dtype's
        # packed-sublane multiple (and to the inner chunk size when large).
        br = min(eff_rows, rows_total)
        if br >= _CHUNK_ROWS:
            br -= br % _CHUNK_ROWS      # _CHUNK_ROWS is a multiple of 8/16/32
            chunk = _CHUNK_ROWS
        else:
            br -= br % req
            chunk = br

        nblocks = pl.cdiv(rows_total, br)
        slices = max(1, min(want_slices, nblocks))
        steps = pl.cdiv(nblocks, slices)
        gate_validity = (slices * steps) > nblocks

        # Zero-copy when n is lane aligned (ravel/reshape are bitcasts).  The
        # misaligned case needs a small prefix slice; allow_input_fusion lets
        # XLA fuse the slice/reshape producers into the custom call instead of
        # materializing HBM copies of both operands.
        if aligned == n:
            xm = x.reshape(rows_total, LANES)
            tm = t.reshape(rows_total, LANES)
            fusion = None
        else:
            xm = x[:aligned].reshape(rows_total, LANES)
            tm = t[:aligned].reshape(rows_total, LANES)
            fusion = [True, True]

        kernel = _make_kernel(br=br, chunk=chunk, steps=steps, nblocks=nblocks,
                              rows_total=rows_total, gate_validity=gate_validity)

        def in_map(s, i):
            # Clamp dummy grid points (core-parallel padding) to the last real
            # block; their contribution is discarded inside the kernel.
            return (jnp.minimum(s * steps + i, nblocks - 1), 0)

        in_spec = pl.BlockSpec((br, LANES), in_map)

        itembytes = (jnp.dtype(x.dtype).itemsize + jnp.dtype(t.dtype).itemsize)
        cost = pl.CostEstimate(
            flops=6 * aligned,
            transcendentals=2 * aligned,               # exp + log per element
            bytes_accessed=aligned * itembytes + slices * 8 * LANES * 4,
        )

        # dimension_semantics: only CORE_PARALLEL actually splits codegen
        # across the two v7x TensorCores; on 1-TC chips the leading axis is 1.
        if slices > 1:
            lead = getattr(pltpu, "CORE_PARALLEL", "parallel")
        else:
            lead = "arbitrary"

        cp_kwargs = dict(dimension_semantics=(lead, "arbitrary"))
        if fusion is not None:
            cp_kwargs["allow_input_fusion"] = fusion
        # Raise the scoped-VMEM limit only if a large user tile needs it
        # (2 inputs x double-buffer), leaving headroom; safe on all chips.
        in_step_bytes = br * LANES * itembytes
        if 2 * in_step_bytes > 12 * 1024 * 1024:
            cp_kwargs["vmem_limit_bytes"] = int(
                min(2 * in_step_bytes + (4 << 20), 48 << 20))

        partial = pl.pallas_call(
            kernel,
            out_shape=jax.ShapeDtypeStruct((slices * 8, LANES), jnp.float32),
            grid_spec=pltpu.PrefetchScalarGridSpec(
                num_scalar_prefetch=0,
                grid=(slices, steps),
                in_specs=[in_spec, in_spec],
                # One lane-dense (8,128) partial-sum block per slice, constant
                # across the reduction axis -> stays resident in VMEM.
                out_specs=pl.BlockSpec((8, LANES), lambda s, i: (s, 0)),
            ),
            compiler_params=pltpu.CompilerParams(**cp_kwargs),
            cost_estimate=cost,
        )(xm, tm)
        total = total + jnp.sum(partial)
        kernel_elems = aligned

    # Sub-128-element remainder (and tiny inputs): plain jnp, negligible.
    if kernel_elems < n:
        total = total + jnp.sum(_bce_elementwise(x[kernel_elems:],
                                                 t[kernel_elems:]))

    if size_average:
        total = total / n
    return total


def _reference(logits, target, size_average=True):
    loss = _bce_elementwise(logits, target)
    return jnp.mean(loss) if size_average else jnp.sum(loss)


if __name__ == "__main__":
    key = jax.random.PRNGKey(0)
    k1, k2, k3, k4 = jax.random.split(key, 4)

    # Small NCHW-like shape consistent with (N, *): batch=2, channels=4, 16x16.
    shape = (2, 4, 16, 16)
    logits = jax.random.normal(k1, shape, dtype=jnp.float32)
    target = jax.random.uniform(k2, shape, dtype=jnp.float32)  # targets in [0,1]

    loss = jax.block_until_ready(
        bce_with_logits_loss(logits, target, size_average=True))
    ref = _reference(logits, target, size_average=True)
    assert jnp.allclose(loss, ref, rtol=1e-5, atol=1e-5), (loss, ref)

    # Sum-reduction path (size_average=False).
    loss_sum = jax.block_until_ready(
        bce_with_logits_loss(logits, target, size_average=False))
    ref_sum = _reference(logits, target, size_average=False)
    assert jnp.allclose(loss_sum, ref_sum, rtol=1e-5, atol=1e-5), (loss_sum, ref_sum)

    # Ragged-block path: rows_total (12) not a multiple of the tile height (8),
    # exercising the in-kernel row mask instead of a wrapper prefix-slice.
    shape_r = (2, 3, 16, 16)
    logits_r = jax.random.normal(k3, shape_r, dtype=jnp.float32)
    target_r = jax.random.uniform(k4, shape_r, dtype=jnp.float32)
    loss_r = jax.block_until_ready(
        bce_with_logits_loss(logits_r, target_r, size_average=True))
    ref_r = _reference(logits_r, target_r, size_average=True)
    assert jnp.allclose(loss_r, ref_r, rtol=1e-5, atol=1e-5), (loss_r, ref_r)

    print("KERNEL_OK")
</pallas_src>

<mosaic_0001>
module attributes {stable_mosaic.version = 11 : i64} {
  func.func @kernel(%arg0: i32, %arg1: i32, %arg2: memref<16x128xf32, #tpu.memory_space<vmem>>, %arg3: memref<16x128xf32, #tpu.memory_space<vmem>>, %arg4: memref<8x128xf32, #tpu.memory_space<vmem>>) attributes {dimension_semantics = [#tpu.dimension_semantics<arbitrary>, #tpu.dimension_semantics<arbitrary>], iteration_bounds = array<i64: 1, 1>, scalar_prefetch = 0 : i64, scratch_operands = 0 : i64, tpu.core_type = #tpu.core_type<tc>, window_params = [{transform_indices = @transform_0, window_bounds = array<i64: 16, 128>}, {transform_indices = @transform_1, window_bounds = array<i64: 16, 128>}, {transform_indices = @transform_2, window_bounds = array<i64: 8, 128>}]} {
    %c0_i32 = arith.constant 0 : i32
    %0 = arith.cmpi eq, %arg1, %c0_i32 : i32
    %1 = arith.extui %0 : i1 to i32
    %c0_i32_0 = arith.constant 0 : i32
    %2 = arith.cmpi ne, %1, %c0_i32_0 : i32
    scf.if %2 {
      %cst_11 = arith.constant 0.000000e+00 : f32
      %22 = vector.broadcast %cst_11 : f32 to vector<8x128xf32>
      %c0_12 = arith.constant 0 : index
      %c0_13 = arith.constant 0 : index
      %23 = vector.load %arg4[%c0_12, %c0_13] : memref<8x128xf32, #tpu.memory_space<vmem>>, vector<8x128xf32>
      tpu.vector_store %arg4[%c0_12, %c0_13], %22 {strides = array<i32>} : memref<8x128xf32, #tpu.memory_space<vmem>>, vector<8x128xf32>,
    } else {
    }
    %cst = arith.constant 0.000000e+00 : f32
    %3 = vector.broadcast %cst : f32 to vector<8x128xf32>
    %c0 = arith.constant 0 : index
    %c0_1 = arith.constant 0 : index
    %4 = vector.load %arg2[%c0, %c0_1] : memref<16x128xf32, #tpu.memory_space<vmem>>, vector<16x128xf32>
    %c0_2 = arith.constant 0 : index
    %c0_3 = arith.constant 0 : index
    %5 = vector.load %arg3[%c0_2, %c0_3] : memref<16x128xf32, #tpu.memory_space<vmem>>, vector<16x128xf32>
    %cst_4 = arith.constant 0.000000e+00 : f32
    %6 = vector.broadcast %cst_4 : f32 to vector<16x128xf32>
    %7 = arith.maximumf %4, %6 : vector<16x128xf32>
    %8 = arith.mulf %4, %5 : vector<16x128xf32>
    %9 = arith.subf %7, %8 : vector<16x128xf32>
    %10 = math.absf %4 : vector<16x128xf32>
    %cst_5 = arith.constant 0.000000e+00 : f32
    %11 = vector.broadcast %cst_5 : f32 to vector<16x128xf32>
    %12 = arith.subf %11, %10 : vector<16x128xf32>
    %13 = math.exp %12 : vector<16x128xf32>
    %14 = math.log1p %13 : vector<16x128xf32>
    %15 = arith.addf %9, %14 : vector<16x128xf32>
    %16 = vector.shape_cast %15 : vector<16x128xf32> to vector<2x8x128xf32>
    %cst_6 = arith.constant dense<0.000000e+00> : vector<8x128xf32>
    %17 = vector.multi_reduction <add>, %16, %cst_6 [0] : vector<2x8x128xf32> to vector<8x128xf32>
    %18 = arith.addf %3, %17 : vector<8x128xf32>
    %c0_7 = arith.constant 0 : index
    %c0_8 = arith.constant 0 : index
    %19 = vector.load %arg4[%c0_7, %c0_8] : memref<8x128xf32, #tpu.memory_space<vmem>>, vector<8x128xf32>
    %20 = arith.addf %19, %18 : vector<8x128xf32>
    %c0_9 = arith.constant 0 : index
    %c0_10 = arith.constant 0 : index
    %21 = vector.load %arg4[%c0_9, %c0_10] : memref<8x128xf32, #tpu.memory_space<vmem>>, vector<8x128xf32>
    tpu.vector_store %arg4[%c0_9, %c0_10], %20 {strides = array<i32>} : memref<8x128xf32, #tpu.memory_space<vmem>>, vector<8x128xf32>,
    return
  }
  func.func @transform_0(%arg0: i32, %arg1: i32) -> (i32, i32) {
    %c1_i32 = arith.constant 1 : i32
    %0 = arith.muli %arg0, %c1_i32 : i32
    %1 = arith.addi %0, %arg1 : i32
    %c0_i32 = arith.constant 0 : i32
    %2 = arith.minsi %1, %c0_i32 : i32
    %c0_i32_0 = arith.constant 0 : i32
    %c0_i32_1 = arith.constant 0 : i32
    return %2, %c0_i32_0 : i32, i32
  }
  func.func @transform_1(%arg0: i32, %arg1: i32) -> (i32, i32) {
    %c1_i32 = arith.constant 1 : i32
    %0 = arith.muli %arg0, %c1_i32 : i32
    %1 = arith.addi %0, %arg1 : i32
    %c0_i32 = arith.constant 0 : i32
    %2 = arith.minsi %1, %c0_i32 : i32
    %c0_i32_0 = arith.constant 0 : i32
    %c0_i32_1 = arith.constant 0 : i32
    return %2, %c0_i32_0 : i32, i32
  }
  func.func @transform_2(%arg0: i32, %arg1: i32) -> (i32, i32) {
    %c0_i32 = arith.constant 0 : i32
    %c0_i32_0 = arith.constant 0 : i32
    return %arg0, %c0_i32 : i32, i32
  }
}

</mosaic_0001>

<llo_original>
// kernel: tpu_custom_call.1
$region0: #{tpu_custom_call.1}
  #allocation0 [shape = 'u32[]', space=smem, size = 0x4, offset = 0x4, fixed_abs, tag = 'smem constant byte address 0x4 - core index']
  #allocation1 [shape = 'u32[144,128]{1,0:T(1,128)}', space=vmem, size = 0x12000, scoped, tag = 'internal scratch']
  %s0 = inlined_call_operand.hbm [shape: f32[16,128], index: 0, kind: input, shape index: {}]
  %s1 = inlined_call_operand.hbm [shape: f32[16,128], index: 1, kind: input, shape index: {}]
  %s2 = inlined_call_operand.hbm [shape: f32[8,128], index: 2, kind: output, shape index: {}]
  %s3 = sld [smem:[#allocation0]]
  $region30: #{tpu_custom_call.1} parent=0
    _
  %s5 = ssub.s32 1, %s3
  %s6 = scalar_select 0, %s5, %s3
  $region1: #{tpu_custom_call.1} parent=0
    #allocation2 [shape = 'u8[8192]{0}', space=vmem, size = 0x2000, scoped, tag = 'input window, operand 0, single buffered']
    #allocation3 [shape = 's32[1]{0}', space=sflag, size = 0x4, scoped, tag = 'scoped memory for tpu_custom_call.1']
    #allocation4 [shape = 's32[1]{0}', space=sflag, size = 0x4, scoped, tag = 'scoped memory for tpu_custom_call.1']
    #allocation5 [shape = 'u8[8192]{0}', space=vmem, size = 0x2000, scoped, tag = 'input window, operand 1, single buffered']
    #allocation6 [shape = 's32[1]{0}', space=sflag, size = 0x4, scoped, tag = 'scoped memory for tpu_custom_call.1']
    #allocation7 [shape = 'u8[4096]{0}', space=vmem, size = 0x1000, scoped, tag = 'output window, operand 0, single buffered']
    %7 = vsyncpa [#allocation3], 0
    %8 = vsyncpa [#allocation6], 0
    %9 = vsyncpa [#allocation4], 0
    // Predicated region
    $region2: #{tpu_custom_call.1} parent=1 // pred_check
      _
    $region3: #{tpu_custom_call.1} parent=1 // pred_check_branch
      %11 = sbr.rel (0) target = $region5
    $region4: #{tpu_custom_call.1} parent=1 // pred_region
      %s12 = sadd.s32 0, 0
      %p13 = scmp.lt.s32.totalorder %s12, 0
      %s14 = scalar_select %p13, %s12, 0
      %s15 = smul.u32 2, %s14
      %s17 = ssub.s32 256, 256
      %18 = vsyncadd [#allocation3], %s17
      %s19 = smul.addr %s15, 128
      %s20 = scalar_lea.hbm %s0, %s19
      %s21 = sshll.u32 [#allocation2], 4
      %s22 = int_to_ptr.vmem [resolvable:$true] %s21
      %27 = dma.hbm_to_vmem [thread:$0]  %s20, 256, %s22, [#allocation3], 128, 128, 8
    $region5: #{tpu_custom_call.1} parent=1 // pred_fallthru
      _
    // Predicated region
    $region6: #{tpu_custom_call.1} parent=1 // pred_check
      _
    $region7: #{tpu_custom_call.1} parent=1 // pred_check_branch
      %29 = sbr.rel (0) target = $region9
    $region8: #{tpu_custom_call.1} parent=1 // pred_region
      %s30 = sadd.s32 0, 0
      %p31 = scmp.lt.s32.totalorder %s30, 0
      %s32 = scalar_select %p31, %s30, 0
      %s33 = smul.u32 2, %s32
      %s35 = ssub.s32 256, 256
      %36 = vsyncadd [#allocation6], %s35
      %s37 = smul.addr %s33, 128
      %s38 = scalar_lea.hbm %s1, %s37
      %s39 = sshll.u32 [#allocation5], 4
      %s40 = int_to_ptr.vmem [resolvable:$true] %s39
      %45 = dma.hbm_to_vmem [thread:$0]  %s38, 256, %s40, [#allocation6], 128, 128, 8
    $region9: #{tpu_custom_call.1} parent=1 // pred_fallthru
      _
    // Predicated region
    $region10: #{tpu_custom_call.1} parent=1 // pred_check
      _
    $region11: #{tpu_custom_call.1} parent=1 // pred_check_branch
      %47 = sbr.rel (0) target = $region13
    $region12: #{tpu_custom_call.1} parent=1 // pred_region
      %48 = dma.done [#allocation3], 256
    $region13: #{tpu_custom_call.1} parent=1 // pred_fallthru
      _
    // Predicated region
    $region14: #{tpu_custom_call.1} parent=1 // pred_check
      _
    $region15: #{tpu_custom_call.1} parent=1 // pred_check_branch
      %50 = sbr.rel (0) target = $region17
    $region16: #{tpu_custom_call.1} parent=1 // pred_region
      %51 = dma.done [#allocation6], 256
    $region17: #{tpu_custom_call.1} parent=1 // pred_fallthru
      _
    %s52 = sadd.s32 0, 0
    %p53 = scmp.lt.s32.totalorder %s52, 0
    %s54 = scalar_select %p53, %s52, 0
    %s55 = smul.u32 2, %s54
    %s56 = sadd.s32 0, 0
    %p57 = scmp.lt.s32.totalorder %s56, 0
    %s58 = scalar_select %p57, %s56, 0
    %s59 = smul.u32 2, %s58
    %p60 = scmp.eq.s32.totalorder 0, 0
    // Predicated region
    $region18: #{tpu_custom_call.1} parent=1 // pred_check
      %p61 = pneg %p60
    $region19: #{tpu_custom_call.1} parent=1 // pred_check_branch
      %63 = sbr.rel (%p61) target = $region21
    $region20: #{tpu_custom_call.1} parent=1 // pred_region
      %64 = vst [vmem:[#allocation7] sm:$0xff] 0.0
    $region21: #{tpu_custom_call.1} parent=1 // pred_fallthru
      _
    %v65 = vld [vmem:[#allocation2] sm:$0xff]
    %v66 = vld [vmem:[#allocation2 + $0x8] sm:$0xff]
    %v67 = vld [vmem:[#allocation5] sm:$0xff]
    %v68 = vld [vmem:[#allocation5 + $0x8] sm:$0xff]
    %v69 = vmax.f32 %v65, 0.0
    %v70 = vmax.f32 %v66, 0.0
    %v71 = vmul.f32 %v65, %v67
    %v72 = vmul.f32 %v66, %v68
    %v73 = vsub.f32 %v69, %v71
    %v74 = vsub.f32 %v70, %v72
    %v75 = vand.u32 2147483647, %v65
    %v76 = vand.u32 2147483647, %v66
    %v77 = vsub.f32 0.0, %v75
    %v78 = vsub.f32 0.0, %v76
    %v79 = vmul.f32 %v77, 1.442695
    %v80 = vpow.pop %v79
    %v81 = vmul.f32 %v78, 1.442695
    %v82 = vpow.pop %v81
    %v83 = vadd.f32 %v80, 1.0
    %v84 = vlog2.pop %v83
    %v85 = vmul.f32 %v84, 0.6931472
    %v86 = vmul.f32 -0.5, %v80
    %v87 = vadd.f32 %v86, 1.0
    %v88 = vmul.f32 %v87, %v80
    %v89 = vand.u32 2147483647, %v80
    %vm90 = vcmp.lt.f32.partialorder %v89, 0.0004427343
    %v91 = vsel %vm90, %v88, %v85
    %v92 = vadd.f32 %v82, 1.0
    %v93 = vlog2.pop %v92
    %v94 = vmul.f32 %v93, 0.6931472
    %v95 = vmul.f32 -0.5, %v82
    %v96 = vadd.f32 %v95, 1.0
    %v97 = vmul.f32 %v96, %v82
    %v98 = vand.u32 2147483647, %v82
    %vm99 = vcmp.lt.f32.partialorder %v98, 0.0004427343
    %v100 = vsel %vm99, %v97, %v94
    %v101 = vadd.f32 %v73, %v91
    %v102 = vadd.f32 %v74, %v100
    %v103 = vadd.f32 %v101, %v102
    %v104 = vadd.f32 %v103, 0.0
    %v105 = vld [vmem:[#allocation7] sm:$0xff]
    %v106 = vadd.f32 %v105, %v104
    %107 = vst [vmem:[#allocation7] sm:$0xff] %v106
    // Predicated region
    $region22: #{tpu_custom_call.1} parent=1 // pred_check
      _
    $region23: #{tpu_custom_call.1} parent=1 // pred_check_branch
      %109 = sbr.rel (0) target = $region25
    $region24: #{tpu_custom_call.1} parent=1 // pred_region
      %s111 = ssub.s32 128, 128
      %112 = vsyncadd [#allocation4], %s111
      %s114 = sshll.u32 [#allocation7], 4
      %s115 = int_to_ptr.vmem [resolvable:$true] %s114
      %117 = dma.vmem_to_hbm [thread:$0]  %s115, 128, %s2, [#allocation4]
    $region25: #{tpu_custom_call.1} parent=1 // pred_fallthru
      _
    // Predicated region
    $region26: #{tpu_custom_call.1} parent=1 // pred_check
      _
    $region27: #{tpu_custom_call.1} parent=1 // pred_check_branch
      %119 = sbr.rel (0) target = $region29
    $region28: #{tpu_custom_call.1} parent=1 // pred_region
      %120 = dma.done [#allocation4], 128
    $region29: #{tpu_custom_call.1} parent=1 // pred_fallthru
      _
    %121 = vsyncpa [#allocation3], 1
    %122 = vsyncpa [#allocation6], 1
    %123 = vsyncpa [#allocation4], 1

</llo_original>
